<compile_context>
chip_gen: v6e
topology: v6e:2x2x1
jax: 0.10.0
libtpu: 0.0.40
codegen_flags: <defaults>
</compile_context>

<pallas_src>
import functools

import jax
import jax.numpy as jnp
from jax.experimental import pallas as pl
from jax.experimental.pallas import tpu as pltpu


def _mlp_fused_kernel(*refs, n_layers):
    """refs = (x_ref, [wt_i, b_i, gamma_i, beta_i] * n_layers, o_ref)."""
    x_ref = refs[0]
    o_ref = refs[-1]
    p_refs = refs[1:-1]

    h = x_ref[...]  # [B, F_in], f32
    for i in range(n_layers):
        wt = p_refs[4 * i][...]         # [F_in, F_out]
        b = p_refs[4 * i + 1][...]      # [1, F_out]
        gamma = p_refs[4 * i + 2][...]  # [1, F_out]
        beta = p_refs[4 * i + 3][...]   # [1, F_out]

        # Linear.
        y = jnp.dot(h, wt, preferred_element_type=jnp.float32) + b

        # BatchNorm1d, training-mode statistics over the batch axis
        # (biased variance, eps = 1e-5).
        mean = jnp.mean(y, axis=0, keepdims=True)
        centered = y - mean
        var = jnp.mean(centered * centered, axis=0, keepdims=True)
        scale = gamma * jax.lax.rsqrt(var + 1e-5)   # fold gamma into the scale
        z = centered * scale + beta

        # Activation: ReLU for hidden blocks, Sigmoid for the final block.
        if i == n_layers - 1:
            h = jax.nn.sigmoid(z)
        else:
            h = jnp.maximum(z, 0.0)

    o_ref[...] = h.astype(o_ref.dtype)


def make_mlp_forward(params):
    """Pre-processes parameters once and returns a jitted forward(x) -> [B, num_out]."""
    n_layers = len(params)
    num_out = params[-1]["w"].shape[0]

    # One-time parameter prep: transpose weights, 2-D-ify bias/gamma/beta.
    flat_params = []
    for p in params:
        flat_params.append(jnp.asarray(p["w"], jnp.float32).T)                  # [F_in, F_out]
        flat_params.append(jnp.asarray(p["b"], jnp.float32).reshape(1, -1))     # [1, F_out]
        flat_params.append(jnp.asarray(p["gamma"], jnp.float32).reshape(1, -1))
        flat_params.append(jnp.asarray(p["beta"], jnp.float32).reshape(1, -1))

    kernel = functools.partial(_mlp_fused_kernel, n_layers=n_layers)
    vmem = pl.BlockSpec(memory_space=pltpu.MemorySpace.VMEM)

    @jax.jit
    def forward(x):
        x = x.astype(jnp.float32)
        B = x.shape[0]
        return pl.pallas_call(
            kernel,
            out_shape=jax.ShapeDtypeStruct((B, num_out), jnp.float32),
            in_specs=[vmem] * (1 + 4 * n_layers),
            out_specs=vmem,
        )(x, *flat_params)

    return forward


def init_block_params(key, num_in, num_out):
    """Deterministic init mimicking PyTorch defaults (uniform +-1/sqrt(fan_in))."""
    kw, kb = jax.random.split(key)
    bound = 1.0 / jnp.sqrt(jnp.float32(num_in))
    w = jax.random.uniform(kw, (num_out, num_in), jnp.float32, -bound, bound)
    b = jax.random.uniform(kb, (num_out,), jnp.float32, -bound, bound)
    gamma = jnp.ones((num_out,), jnp.float32)
    beta = jnp.zeros((num_out,), jnp.float32)
    return dict(w=w, b=b, gamma=gamma, beta=beta)


def init_mlp_params(key, num_in, num_out, num_hid):
    dims = [num_in] + list(num_hid) + [num_out]
    keys = jax.random.split(key, len(dims) - 1)
    return [init_block_params(keys[i], dims[i], dims[i + 1]) for i in range(len(dims) - 1)]


def mlp_reference(params, x):
    """Pure-JAX reference for numerical validation."""
    h = jnp.asarray(x, jnp.float32)
    n_layers = len(params)
    for i, p in enumerate(params):
        y = h @ jnp.asarray(p["w"], jnp.float32).T + jnp.asarray(p["b"], jnp.float32)
        mean = jnp.mean(y, axis=0, keepdims=True)
        centered = y - mean
        var = jnp.mean(centered * centered, axis=0, keepdims=True)
        z = centered * jax.lax.rsqrt(var + 1e-5) * p["gamma"] + p["beta"]
        h = jax.nn.sigmoid(z) if i == n_layers - 1 else jnp.maximum(z, 0.0)
    return h


if __name__ == "__main__":
    # Small shapes consistent with the module: num_in=16, num_hid=[32, 32], num_out=8
    batch = 8
    num_in = 16
    num_hid = [32, 32]
    num_out = 8

    key = jax.random.PRNGKey(0)
    k_params, k_x = jax.random.split(key)
    params = init_mlp_params(k_params, num_in, num_out, num_hid)
    x = jax.random.normal(k_x, (batch, num_in), jnp.float32)

    forward = make_mlp_forward(params)
    out = jax.block_until_ready(forward(x))

    assert out.shape == (batch, num_out), out.shape
    assert bool(jnp.all(jnp.isfinite(out)))
    # Final block is Sigmoid -> output must lie in (0, 1)
    assert bool(jnp.all(out > 0.0)) and bool(jnp.all(out < 1.0))

    # Numerical check against a pure-JAX reference.
    ref = mlp_reference(params, x)
    assert bool(jnp.allclose(out, ref, rtol=1e-4, atol=1e-4)), float(jnp.max(jnp.abs(out - ref)))

    print("KERNEL_OK")
</pallas_src>

<mosaic_0001>
module attributes {stable_mosaic.version = 11 : i64} {
  func.func @_mlp_fused_kernel(%arg0: memref<8x16xf32, #tpu.memory_space<vmem>>, %arg1: memref<16x32xf32, #tpu.memory_space<vmem>>, %arg2: memref<1x32xf32, #tpu.memory_space<vmem>>, %arg3: memref<1x32xf32, #tpu.memory_space<vmem>>, %arg4: memref<1x32xf32, #tpu.memory_space<vmem>>, %arg5: memref<32x32xf32, #tpu.memory_space<vmem>>, %arg6: memref<1x32xf32, #tpu.memory_space<vmem>>, %arg7: memref<1x32xf32, #tpu.memory_space<vmem>>, %arg8: memref<1x32xf32, #tpu.memory_space<vmem>>, %arg9: memref<32x8xf32, #tpu.memory_space<vmem>>, %arg10: memref<1x8xf32, #tpu.memory_space<vmem>>, %arg11: memref<1x8xf32, #tpu.memory_space<vmem>>, %arg12: memref<1x8xf32, #tpu.memory_space<vmem>>, %arg13: memref<8x8xf32, #tpu.memory_space<vmem>>) attributes {dimension_semantics = [], scalar_prefetch = 0 : i64, scratch_operands = 0 : i64, tpu.core_type = #tpu.core_type<tc>} {
    %c0 = arith.constant 0 : index
    %c0_0 = arith.constant 0 : index
    %0 = vector.load %arg0[%c0, %c0_0] : memref<8x16xf32, #tpu.memory_space<vmem>>, vector<8x16xf32>
    %c0_1 = arith.constant 0 : index
    %c0_2 = arith.constant 0 : index
    %1 = vector.load %arg1[%c0_1, %c0_2] : memref<16x32xf32, #tpu.memory_space<vmem>>, vector<16x32xf32>
    %c0_3 = arith.constant 0 : index
    %c0_4 = arith.constant 0 : index
    %2 = vector.load %arg2[%c0_3, %c0_4] : memref<1x32xf32, #tpu.memory_space<vmem>>, vector<1x32xf32>
    %c0_5 = arith.constant 0 : index
    %c0_6 = arith.constant 0 : index
    %3 = vector.load %arg3[%c0_5, %c0_6] : memref<1x32xf32, #tpu.memory_space<vmem>>, vector<1x32xf32>
    %c0_7 = arith.constant 0 : index
    %c0_8 = arith.constant 0 : index
    %4 = vector.load %arg4[%c0_7, %c0_8] : memref<1x32xf32, #tpu.memory_space<vmem>>, vector<1x32xf32>
    %cst = arith.constant dense<0.000000e+00> : vector<8x32xf32>
    %5 = tpu.matmul %0, %1, %cst {dimension_numbers = #tpu.dot_dimension_numbers<[1], [0], [0], [1], [0, 0, 1, 1], [], []>} : vector<8x16xf32>, vector<16x32xf32>, vector<8x32xf32> -> vector<8x32xf32>
    %6 = vector.broadcast %2 : vector<1x32xf32> to vector<8x32xf32>
    %7 = arith.addf %5, %6 : vector<8x32xf32>
    %cst_9 = arith.constant dense<0.000000e+00> : vector<32xf32>
    %8 = vector.multi_reduction <add>, %7, %cst_9 [0] : vector<8x32xf32> to vector<32xf32>
    %9 = vector.shape_cast %8 : vector<32xf32> to vector<1x32xf32>
    %cst_10 = arith.constant 8.000000e+00 : f32
    %10 = vector.broadcast %cst_10 : f32 to vector<1x32xf32>
    %11 = arith.divf %9, %10 : vector<1x32xf32>
    %12 = vector.broadcast %11 : vector<1x32xf32> to vector<8x32xf32>
    %13 = arith.subf %7, %12 : vector<8x32xf32>
    %14 = arith.mulf %13, %13 : vector<8x32xf32>
    %cst_11 = arith.constant dense<0.000000e+00> : vector<32xf32>
    %15 = vector.multi_reduction <add>, %14, %cst_11 [0] : vector<8x32xf32> to vector<32xf32>
    %16 = vector.shape_cast %15 : vector<32xf32> to vector<1x32xf32>
    %cst_12 = arith.constant 8.000000e+00 : f32
    %17 = vector.broadcast %cst_12 : f32 to vector<1x32xf32>
    %18 = arith.divf %16, %17 : vector<1x32xf32>
    %cst_13 = arith.constant 9.99999974E-6 : f32
    %19 = vector.broadcast %cst_13 : f32 to vector<1x32xf32>
    %20 = arith.addf %18, %19 : vector<1x32xf32>
    %21 = math.rsqrt %20 : vector<1x32xf32>
    %22 = arith.mulf %3, %21 : vector<1x32xf32>
    %23 = vector.broadcast %22 : vector<1x32xf32> to vector<8x32xf32>
    %24 = arith.mulf %13, %23 : vector<8x32xf32>
    %25 = vector.broadcast %4 : vector<1x32xf32> to vector<8x32xf32>
    %26 = arith.addf %24, %25 : vector<8x32xf32>
    %cst_14 = arith.constant 0.000000e+00 : f32
    %27 = vector.broadcast %cst_14 : f32 to vector<8x32xf32>
    %28 = arith.maximumf %26, %27 : vector<8x32xf32>
    %c0_15 = arith.constant 0 : index
    %c0_16 = arith.constant 0 : index
    %29 = vector.load %arg5[%c0_15, %c0_16] : memref<32x32xf32, #tpu.memory_space<vmem>>, vector<32x32xf32>
    %c0_17 = arith.constant 0 : index
    %c0_18 = arith.constant 0 : index
    %30 = vector.load %arg6[%c0_17, %c0_18] : memref<1x32xf32, #tpu.memory_space<vmem>>, vector<1x32xf32>
    %c0_19 = arith.constant 0 : index
    %c0_20 = arith.constant 0 : index
    %31 = vector.load %arg7[%c0_19, %c0_20] : memref<1x32xf32, #tpu.memory_space<vmem>>, vector<1x32xf32>
    %c0_21 = arith.constant 0 : index
    %c0_22 = arith.constant 0 : index
    %32 = vector.load %arg8[%c0_21, %c0_22] : memref<1x32xf32, #tpu.memory_space<vmem>>, vector<1x32xf32>
    %cst_23 = arith.constant dense<0.000000e+00> : vector<8x32xf32>
    %33 = tpu.matmul %28, %29, %cst_23 {dimension_numbers = #tpu.dot_dimension_numbers<[1], [0], [0], [1], [0, 0, 1, 1], [], []>} : vector<8x32xf32>, vector<32x32xf32>, vector<8x32xf32> -> vector<8x32xf32>
    %34 = vector.broadcast %30 : vector<1x32xf32> to vector<8x32xf32>
    %35 = arith.addf %33, %34 : vector<8x32xf32>
    %cst_24 = arith.constant dense<0.000000e+00> : vector<32xf32>
    %36 = vector.multi_reduction <add>, %35, %cst_24 [0] : vector<8x32xf32> to vector<32xf32>
    %37 = vector.shape_cast %36 : vector<32xf32> to vector<1x32xf32>
    %cst_25 = arith.constant 8.000000e+00 : f32
    %38 = vector.broadcast %cst_25 : f32 to vector<1x32xf32>
    %39 = arith.divf %37, %38 : vector<1x32xf32>
    %40 = vector.broadcast %39 : vector<1x32xf32> to vector<8x32xf32>
    %41 = arith.subf %35, %40 : vector<8x32xf32>
    %42 = arith.mulf %41, %41 : vector<8x32xf32>
    %cst_26 = arith.constant dense<0.000000e+00> : vector<32xf32>
    %43 = vector.multi_reduction <add>, %42, %cst_26 [0] : vector<8x32xf32> to vector<32xf32>
    %44 = vector.shape_cast %43 : vector<32xf32> to vector<1x32xf32>
    %cst_27 = arith.constant 8.000000e+00 : f32
    %45 = vector.broadcast %cst_27 : f32 to vector<1x32xf32>
    %46 = arith.divf %44, %45 : vector<1x32xf32>
    %cst_28 = arith.constant 9.99999974E-6 : f32
    %47 = vector.broadcast %cst_28 : f32 to vector<1x32xf32>
    %48 = arith.addf %46, %47 : vector<1x32xf32>
    %49 = math.rsqrt %48 : vector<1x32xf32>
    %50 = arith.mulf %31, %49 : vector<1x32xf32>
    %51 = vector.broadcast %50 : vector<1x32xf32> to vector<8x32xf32>
    %52 = arith.mulf %41, %51 : vector<8x32xf32>
    %53 = vector.broadcast %32 : vector<1x32xf32> to vector<8x32xf32>
    %54 = arith.addf %52, %53 : vector<8x32xf32>
    %cst_29 = arith.constant 0.000000e+00 : f32
    %55 = vector.broadcast %cst_29 : f32 to vector<8x32xf32>
    %56 = arith.maximumf %54, %55 : vector<8x32xf32>
    %c0_30 = arith.constant 0 : index
    %c0_31 = arith.constant 0 : index
    %57 = vector.load %arg9[%c0_30, %c0_31] : memref<32x8xf32, #tpu.memory_space<vmem>>, vector<32x8xf32>
    %c0_32 = arith.constant 0 : index
    %c0_33 = arith.constant 0 : index
    %58 = vector.load %arg10[%c0_32, %c0_33] : memref<1x8xf32, #tpu.memory_space<vmem>>, vector<1x8xf32>
    %c0_34 = arith.constant 0 : index
    %c0_35 = arith.constant 0 : index
    %59 = vector.load %arg11[%c0_34, %c0_35] : memref<1x8xf32, #tpu.memory_space<vmem>>, vector<1x8xf32>
    %c0_36 = arith.constant 0 : index
    %c0_37 = arith.constant 0 : index
    %60 = vector.load %arg12[%c0_36, %c0_37] : memref<1x8xf32, #tpu.memory_space<vmem>>, vector<1x8xf32>
    %cst_38 = arith.constant dense<0.000000e+00> : vector<8x8xf32>
    %61 = tpu.matmul %56, %57, %cst_38 {dimension_numbers = #tpu.dot_dimension_numbers<[1], [0], [0], [1], [0, 0, 1, 1], [], []>} : vector<8x32xf32>, vector<32x8xf32>, vector<8x8xf32> -> vector<8x8xf32>
    %62 = vector.broadcast %58 : vector<1x8xf32> to vector<8x8xf32>
    %63 = arith.addf %61, %62 : vector<8x8xf32>
    %cst_39 = arith.constant dense<0.000000e+00> : vector<8xf32>
    %64 = vector.multi_reduction <add>, %63, %cst_39 [0] : vector<8x8xf32> to vector<8xf32>
    %65 = vector.shape_cast %64 : vector<8xf32> to vector<1x8xf32>
    %cst_40 = arith.constant 8.000000e+00 : f32
    %66 = vector.broadcast %cst_40 : f32 to vector<1x8xf32>
    %67 = arith.divf %65, %66 : vector<1x8xf32>
    %68 = vector.broadcast %67 : vector<1x8xf32> to vector<8x8xf32>
    %69 = arith.subf %63, %68 : vector<8x8xf32>
    %70 = arith.mulf %69, %69 : vector<8x8xf32>
    %cst_41 = arith.constant dense<0.000000e+00> : vector<8xf32>
    %71 = vector.multi_reduction <add>, %70, %cst_41 [0] : vector<8x8xf32> to vector<8xf32>
    %72 = vector.shape_cast %71 : vector<8xf32> to vector<1x8xf32>
    %cst_42 = arith.constant 8.000000e+00 : f32
    %73 = vector.broadcast %cst_42 : f32 to vector<1x8xf32>
    %74 = arith.divf %72, %73 : vector<1x8xf32>
    %cst_43 = arith.constant 9.99999974E-6 : f32
    %75 = vector.broadcast %cst_43 : f32 to vector<1x8xf32>
    %76 = arith.addf %74, %75 : vector<1x8xf32>
    %77 = math.rsqrt %76 : vector<1x8xf32>
    %78 = arith.mulf %59, %77 : vector<1x8xf32>
    %79 = vector.broadcast %78 : vector<1x8xf32> to vector<8x8xf32>
    %80 = arith.mulf %69, %79 : vector<8x8xf32>
    %81 = vector.broadcast %60 : vector<1x8xf32> to vector<8x8xf32>
    %82 = arith.addf %80, %81 : vector<8x8xf32>
    %83 = arith.negf %82 : vector<8x8xf32>
    %84 = math.exp %83 : vector<8x8xf32>
    %cst_44 = arith.constant 1.000000e+00 : f32
    %85 = vector.broadcast %cst_44 : f32 to vector<8x8xf32>
    %86 = arith.addf %85, %84 : vector<8x8xf32>
    %87 = arith.divf %85, %86 : vector<8x8xf32>
    %c0_45 = arith.constant 0 : index
    %c0_46 = arith.constant 0 : index
    %88 = vector.load %arg13[%c0_45, %c0_46] : memref<8x8xf32, #tpu.memory_space<vmem>>, vector<8x8xf32>
    tpu.vector_store %arg13[%c0_45, %c0_46], %87 {strides = array<i32>} : memref<8x8xf32, #tpu.memory_space<vmem>>, vector<8x8xf32>,
    return
  }
}

</mosaic_0001>

<llo_original>
// kernel: forward.1
$region0: #{forward.1}
  #allocation0 [shape = 'u32[]', space=smem, size = 0x4, offset = 0x4, fixed_abs, tag = 'smem constant byte address 0x4 - core index']
  #allocation1 [shape = 'u32[144,128]{1,0:T(1,128)}', space=vmem, size = 0x12000, scoped, tag = 'internal scratch']
  %s0 = inlined_call_operand.hbm [shape: f32[8,16], index: 0, kind: input, shape index: {}]
  %s1 = inlined_call_operand.hbm [shape: f32[16,32], index: 1, kind: input, shape index: {}]
  %s2 = inlined_call_operand.vmem [shape: f32[1,32], index: 2, kind: input, shape index: {}]
  %s3 = inlined_call_operand.vmem [shape: f32[1,32], index: 3, kind: input, shape index: {}, may-alias: {3,7}]
  %s4 = inlined_call_operand.vmem [shape: f32[1,32], index: 4, kind: input, shape index: {}, may-alias: {4,8}]
  %s5 = inlined_call_operand.hbm [shape: f32[32,32], index: 5, kind: input, shape index: {}]
  %s6 = inlined_call_operand.vmem [shape: f32[1,32], index: 6, kind: input, shape index: {}]
  %s7 = inlined_call_operand.vmem [shape: f32[1,32], index: 7, kind: input, shape index: {}, may-alias: {3,7}]
  %s8 = inlined_call_operand.vmem [shape: f32[1,32], index: 8, kind: input, shape index: {}, may-alias: {4,8}]
  %s9 = inlined_call_operand.hbm [shape: f32[32,8], index: 9, kind: input, shape index: {}]
  %s10 = inlined_call_operand.vmem [shape: f32[1,8], index: 10, kind: input, shape index: {}]
  %s11 = inlined_call_operand.vmem [shape: f32[1,8], index: 11, kind: input, shape index: {}]
  %s12 = inlined_call_operand.vmem [shape: f32[1,8], index: 12, kind: input, shape index: {}]
  %s13 = inlined_call_operand.hbm [shape: f32[8,8], index: 13, kind: output, shape index: {}]
  %s14 = sld [smem:[#allocation0]]
  $region78: #{forward.1} parent=0
    _
  %s16 = ssub.s32 1, %s14
  %s17 = scalar_select 0, %s16, %s14
  $region1: #{forward.1} parent=0
    #allocation2 [shape = 'u8[4096]{0}', space=vmem, size = 0x1000, scoped, tag = 'input window, operand 0, single buffered']
    #allocation3 [shape = 's32[1]{0}', space=sflag, size = 0x4, scoped, tag = 'scoped memory for forward.1']
    #allocation4 [shape = 's32[1]{0}', space=sflag, size = 0x4, scoped, tag = 'scoped memory for forward.1']
    #allocation5 [shape = 'u8[8192]{0}', space=vmem, size = 0x2000, scoped, tag = 'input window, operand 1, single buffered']
    #allocation6 [shape = 's32[1]{0}', space=sflag, size = 0x4, scoped, tag = 'scoped memory for forward.1']
    #allocation7 [shape = 'u8[16384]{0}', space=vmem, size = 0x4000, scoped, tag = 'input window, operand 5, single buffered']
    #allocation8 [shape = 'u8[16384]{0}', space=vmem, size = 0x4000, scoped, tag = 'input window, operand 9, single buffered']
    #allocation9 [shape = 's32[1]{0}', space=sflag, size = 0x4, scoped, tag = 'scoped memory for forward.1']
    #allocation10 [shape = 'u8[4096]{0}', space=vmem, size = 0x1000, scoped, tag = 'output window, operand 0, single buffered']
    %18 = vsyncpa [#allocation3], 0
    %19 = vsyncpa [#allocation6], 0
    %20 = vsyncpa [#allocation9], 0
    %21 = vsyncpa [#allocation4], 0
    // Predicated region
    $region2: #{forward.1} parent=1 // pred_check
      _
    $region3: #{forward.1} parent=1 // pred_check_branch
      %23 = sbr.rel (0) target = $region5
    $region4: #{forward.1} parent=1 // pred_region
      %s25 = ssub.s32 128, 128
      %26 = vsyncadd [#allocation3], %s25
      %s28 = sshll.u32 [#allocation2], 4
      %s29 = int_to_ptr.vmem [resolvable:$true] %s28
      %31 = dma.hbm_to_vmem [thread:$0]  %s0, 128, %s29, [#allocation3]
    $region5: #{forward.1} parent=1 // pred_fallthru
      _
    // Predicated region
    $region6: #{forward.1} parent=1 // pred_check
      _
    $region7: #{forward.1} parent=1 // pred_check_branch
      %33 = sbr.rel (0) target = $region9
    $region8: #{forward.1} parent=1 // pred_region
      %s35 = ssub.s32 256, 256
      %36 = vsyncadd [#allocation6], %s35
      %s37 = sshll.u32 [#allocation5], 4
      %s38 = int_to_ptr.vmem [resolvable:$true] %s37
      %43 = dma.hbm_to_vmem [thread:$0]  %s1, 256, %s38, [#allocation6], 128, 128, 8
    $region9: #{forward.1} parent=1 // pred_fallthru
      _
    // Predicated region
    $region10: #{forward.1} parent=1 // pred_check
      _
    $region11: #{forward.1} parent=1 // pred_check_branch
      %45 = sbr.rel (0) target = $region13
    $region12: #{forward.1} parent=1 // pred_region
      _
    $region13: #{forward.1} parent=1 // pred_fallthru
      _
    // Predicated region
    $region14: #{forward.1} parent=1 // pred_check
      _
    $region15: #{forward.1} parent=1 // pred_check_branch
      %47 = sbr.rel (0) target = $region17
    $region16: #{forward.1} parent=1 // pred_region
      _
    $region17: #{forward.1} parent=1 // pred_fallthru
      _
    // Predicated region
    $region18: #{forward.1} parent=1 // pred_check
      _
    $region19: #{forward.1} parent=1 // pred_check_branch
      %49 = sbr.rel (0) target = $region21
    $region20: #{forward.1} parent=1 // pred_region
      _
    $region21: #{forward.1} parent=1 // pred_fallthru
      _
    // Predicated region
    $region22: #{forward.1} parent=1 // pred_check
      _
    $region23: #{forward.1} parent=1 // pred_check_branch
      %51 = sbr.rel (0) target = $region25
    $region24: #{forward.1} parent=1 // pred_region
      %s53 = ssub.s32 512, 512
      %54 = vsyncadd [#allocation6], %s53
      %s55 = sshll.u32 [#allocation7], 4
      %s56 = int_to_ptr.vmem [resolvable:$true] %s55
      %61 = dma.hbm_to_vmem [thread:$0]  %s5, 512, %s56, [#allocation6], 128, 128, 8
    $region25: #{forward.1} parent=1 // pred_fallthru
      _
    // Predicated region
    $region26: #{forward.1} parent=1 // pred_check
      _
    $region27: #{forward.1} parent=1 // pred_check_branch
      %63 = sbr.rel (0) target = $region29
    $region28: #{forward.1} parent=1 // pred_region
      _
    $region29: #{forward.1} parent=1 // pred_fallthru
      _
    // Predicated region
    $region30: #{forward.1} parent=1 // pred_check
      _
    $region31: #{forward.1} parent=1 // pred_check_branch
      %65 = sbr.rel (0) target = $region33
    $region32: #{forward.1} parent=1 // pred_region
      _
    $region33: #{forward.1} parent=1 // pred_fallthru
      _
    // Predicated region
    $region34: #{forward.1} parent=1 // pred_check
      _
    $region35: #{forward.1} parent=1 // pred_check_branch
      %67 = sbr.rel (0) target = $region37
    $region36: #{forward.1} parent=1 // pred_region
      _
    $region37: #{forward.1} parent=1 // pred_fallthru
      _
    // Predicated region
    $region38: #{forward.1} parent=1 // pred_check
      _
    $region39: #{forward.1} parent=1 // pred_check_branch
      %69 = sbr.rel (0) target = $region41
    $region40: #{forward.1} parent=1 // pred_region
      %s71 = ssub.s32 512, 512
      %72 = vsyncadd [#allocation9], %s71
      %s73 = sshll.u32 [#allocation8], 4
      %s74 = int_to_ptr.vmem [resolvable:$true] %s73
      %79 = dma.hbm_to_vmem [thread:$0]  %s9, 512, %s74, [#allocation9], 128, 128, 8
    $region41: #{forward.1} parent=1 // pred_fallthru
      _
    // Predicated region
    $region42: #{forward.1} parent=1 // pred_check
      _
    $region43: #{forward.1} parent=1 // pred_check_branch
      %81 = sbr.rel (0) target = $region45
    $region44: #{forward.1} parent=1 // pred_region
      _
    $region45: #{forward.1} parent=1 // pred_fallthru
      _
    // Predicated region
    $region46: #{forward.1} parent=1 // pred_check
      _
    $region47: #{forward.1} parent=1 // pred_check_branch
      %83 = sbr.rel (0) target = $region49
    $region48: #{forward.1} parent=1 // pred_region
      _
    $region49: #{forward.1} parent=1 // pred_fallthru
      _
    // Predicated region
    $region50: #{forward.1} parent=1 // pred_check
      _
    $region51: #{forward.1} parent=1 // pred_check_branch
      %85 = sbr.rel (0) target = $region53
    $region52: #{forward.1} parent=1 // pred_region
      _
    $region53: #{forward.1} parent=1 // pred_fallthru
      _
    // Predicated region
    $region54: #{forward.1} parent=1 // pred_check
      _
    $region55: #{forward.1} parent=1 // pred_check_branch
      %87 = sbr.rel (0) target = $region57
    $region56: #{forward.1} parent=1 // pred_region
      %88 = dma.done [#allocation3], 128
    $region57: #{forward.1} parent=1 // pred_fallthru
      _
    // Predicated region
    $region58: #{forward.1} parent=1 // pred_check
      _
    $region59: #{forward.1} parent=1 // pred_check_branch
      %90 = sbr.rel (0) target = $region61
    $region60: #{forward.1} parent=1 // pred_region
      %91 = dma.done [#allocation6], 256
    $region61: #{forward.1} parent=1 // pred_fallthru
      _
    // Predicated region
    $region62: #{forward.1} parent=1 // pred_check
      _
    $region63: #{forward.1} parent=1 // pred_check_branch
      %93 = sbr.rel (0) target = $region65
    $region64: #{forward.1} parent=1 // pred_region
      %94 = dma.done [#allocation6], 512
    $region65: #{forward.1} parent=1 // pred_fallthru
      _
    // Predicated region
    $region66: #{forward.1} parent=1 // pred_check
      _
    $region67: #{forward.1} parent=1 // pred_check_branch
      %96 = sbr.rel (0) target = $region69
    $region68: #{forward.1} parent=1 // pred_region
      %97 = dma.done [#allocation9], 512
    $region69: #{forward.1} parent=1 // pred_fallthru
      _
    %v98 = vld [vmem:[#allocation2] sm:$0xff]
    %v99 = vld [vmem:[#allocation5] sm:$0xff]
    %v100 = vld [vmem:[#allocation5 + $0x8] sm:$0xff]
    %v101 = vld [vmem:[%s2] sm:$0x1]
    %v102 = vld [vmem:[%s3] sm:$0x1]
    %v103 = vld [vmem:[%s4] sm:$0x1]
    %v105 = vlaneseq
    %v106 = vshrl.u32 %v105, 7
    %v107 = vsub.s32 0, %v106
    %v108 = vrot.slane %v101, %v107
    %vm110 = vcmask 130048
    %v112 = vsel %vm110, %v98, 0
    %114 = vmatprep.subr.mxu0 0.0
    %115 = vmatpush1.msra.mxu0 0.0
    %116 = vmatprep.subr.mxu0 0.0
    %117 = vmatpush1.msra.mxu0 0.0
    %118 = vmatprep.subr.mxu0 0.0
    %119 = vmatpush1.msra.mxu0 0.0
    %120 = vmatprep.subr.mxu0 0.0
    %121 = vmatpush1.msra.mxu0 0.0
    %122 = vmatprep.subr.mxu0 0.0
    %123 = vmatpush1.msra.mxu0 0.0
    %124 = vmatprep.subr.mxu0 0.0
    %125 = vmatpush1.msra.mxu0 0.0
    %126 = vmatprep.subr.mxu0 0.0
    %127 = vmatpush1.msra.mxu0 0.0
    %128 = vmatprep.subr.mxu0 0.0
    %129 = vmatpush1.msra.mxu0 0.0
    %130 = vmatprep.subr.mxu0 0.0
    %131 = vmatpush1.msra.mxu0 0.0
    %132 = vmatprep.subr.mxu0 0.0
    %133 = vmatpush1.msra.mxu0 0.0
    %134 = vmatprep.subr.mxu0 0.0
    %135 = vmatpush1.msra.mxu0 0.0
    %136 = vmatprep.subr.mxu0 0.0
    %137 = vmatpush1.msra.mxu0 0.0
    %138 = vmatprep.subr.mxu0 0.0
    %139 = vmatpush1.msra.mxu0 0.0
    %140 = vmatprep.subr.mxu0 0.0
    %141 = vmatpush1.msra.mxu0 0.0
    %142 = vmatprep.subr.mxu0 0.0
    %143 = vmatpush1.msra.mxu0 %v100
    %144 = vmatprep.subr.mxu0 0.0
    %145 = vmatpush1.msra.mxu0 %v99
    %146 = vmatprep.subr.mxu0 0.0
    %147 = vmatpush2.msra.mxu0 0.0
    %148 = vmatprep.subr.mxu0 0.0
    %149 = vmatpush2.msra.mxu0 0.0
    %150 = vmatprep.subr.mxu0 0.0
    %151 = vmatpush2.msra.mxu0 0.0
    %152 = vmatprep.subr.mxu0 0.0
    %153 = vmatpush2.msra.mxu0 0.0
    %154 = vmatprep.subr.mxu0 0.0
    %155 = vmatpush2.msra.mxu0 0.0
    %156 = vmatprep.subr.mxu0 0.0
    %157 = vmatpush2.msra.mxu0 0.0
    %158 = vmatprep.subr.mxu0 0.0
    %159 = vmatpush2.msra.mxu0 0.0
    %160 = vmatprep.subr.mxu0 0.0
    %161 = vmatpush2.msra.mxu0 0.0
    %162 = vmatprep.subr.mxu0 0.0
    %163 = vmatpush2.msra.mxu0 0.0
    %164 = vmatprep.subr.mxu0 0.0
    %165 = vmatpush2.msra.mxu0 0.0
    %166 = vmatprep.subr.mxu0 0.0
    %167 = vmatpush2.msra.mxu0 0.0
    %168 = vmatprep.subr.mxu0 0.0
    %169 = vmatpush2.msra.mxu0 0.0
    %170 = vmatprep.subr.mxu0 0.0
    %171 = vmatpush2.msra.mxu0 0.0
    %172 = vmatprep.subr.mxu0 0.0
    %173 = vmatpush2.msra.mxu0 0.0
    %174 = vmatprep.subr.mxu0 0.0
    %175 = vmatpush2.msra.mxu0 0.0
    %176 = vmatprep.subr.mxu0 0.0
    %177 = vmatpush2.msra.mxu0 0.0
    %178 = vmatprep.mubr.f32.mxu0 0.0
    %179 = vmatmul.mubr.f32.gmra.mxu0 %v112
    %v180 = vpop.f32.mrf.mxu0
    %v181 = vadd.f32 %v108, %v180
    %v182 = vpop.f32.mrf.mxu0
    %183 = vdwg.mxu0
    %vm184 = vcmask 261120
    %v185 = vsel %vm184, %v181, 0.0
    %v186 = vrot.slane %v185, 4
    %v187 = vadd.f32 %v185, %v186
    %v188 = vrot.slane %v187, 2
    %v189 = vadd.f32 %v187, %v188
    %v190 = vrot.slane %v189, 1
    %v191 = vadd.f32 %v189, %v190
    %v192 = vrcp.pop 8.0
    %v193 = vmul.f32 %v191, %v192
    %v194 = vsub.f32 %v181, %v193
    %v195 = vmul.f32 %v194, %v194
    %v196 = vsel %vm184, %v195, 0.0
    %v197 = vrot.slane %v196, 4
    %v198 = vadd.f32 %v196, %v197
    %v199 = vrot.slane %v198, 2
    %v200 = vadd.f32 %v198, %v199
    %v201 = vrot.slane %v200, 1
    %v202 = vadd.f32 %v200, %v201
    %v203 = vmul.f32 %v202, %v192
    %v204 = vadd.f32 %v203, 1e-05
    %v205 = vrsqrt.pop %v204
    %v206 = vmul.f32 %v102, %v205
    %v208 = vlaneseq
    %v209 = vshrl.u32 %v208, 7
    %v210 = vsub.s32 0, %v209
    %v211 = vrot.slane %v206, %v210
    %v213 = vmul.f32 %v194, %v211
    %v215 = vlaneseq
    %v216 = vshrl.u32 %v215, 7
    %v217 = vsub.s32 0, %v216
    %v218 = vrot.slane %v103, %v217
    %v220 = vadd.f32 %v213, %v218
    %v221 = vmax.f32 %v220, 0.0
    %v222 = vld [vmem:[#allocation7] sm:$0xff]
    %v223 = vld [vmem:[#allocation7 + $0x8] sm:$0xff]
    %v224 = vld [vmem:[#allocation7 + $0x10] sm:$0xff]
    %v225 = vld [vmem:[#allocation7 + $0x18] sm:$0xff]
    %v226 = vld [vmem:[%s6] sm:$0x1]
    %v227 = vld [vmem:[%s7] sm:$0x1]
    %v228 = vld [vmem:[%s8] sm:$0x1]
    %v230 = vlaneseq
    %v231 = vshrl.u32 %v230, 7
    %v232 = vsub.s32 0, %v231
    %v233 = vrot.slane %v226, %v232
    %v236 = vsel %vm184, %v221, 0
    %238 = vmatprep.subr.mxu0 0.0
    %239 = vmatpush1.msra.mxu0 0.0
    %240 = vmatprep.subr.mxu0 0.0
    %241 = vmatpush1.msra.mxu0 0.0
    %242 = vmatprep.subr.mxu0 0.0
    %243 = vmatpush1.msra.mxu0 0.0
    %244 = vmatprep.subr.mxu0 0.0
    %245 = vmatpush1.msra.mxu0 0.0
    %246 = vmatprep.subr.mxu0 0.0
    %247 = vmatpush1.msra.mxu0 0.0
    %248 = vmatprep.subr.mxu0 0.0
    %249 = vmatpush1.msra.mxu0 0.0
    %250 = vmatprep.subr.mxu0 0.0
    %251 = vmatpush1.msra.mxu0 0.0
    %252 = vmatprep.subr.mxu0 0.0
    %253 = vmatpush1.msra.mxu0 0.0
    %254 = vmatprep.subr.mxu0 0.0
    %255 = vmatpush1.msra.mxu0 0.0
    %256 = vmatprep.subr.mxu0 0.0
    %257 = vmatpush1.msra.mxu0 0.0
    %258 = vmatprep.subr.mxu0 0.0
    %259 = vmatpush1.msra.mxu0 0.0
    %260 = vmatprep.subr.mxu0 0.0
    %261 = vmatpush1.msra.mxu0 0.0
    %262 = vmatprep.subr.mxu0 0.0
    %263 = vmatpush1.msra.mxu0 %v225
    %264 = vmatprep.subr.mxu0 0.0
    %265 = vmatpush1.msra.mxu0 %v224
    %266 = vmatprep.subr.mxu0 0.0
    %267 = vmatpush1.msra.mxu0 %v223
    %268 = vmatprep.subr.mxu0 0.0
    %269 = vmatpush1.msra.mxu0 %v222
    %270 = vmatprep.subr.mxu0 0.0
    %271 = vmatpush2.msra.mxu0 0.0
    %272 = vmatprep.subr.mxu0 0.0
    %273 = vmatpush2.msra.mxu0 0.0
    %274 = vmatprep.subr.mxu0 0.0
    %275 = vmatpush2.msra.mxu0 0.0
    %276 = vmatprep.subr.mxu0 0.0
    %277 = vmatpush2.msra.mxu0 0.0
    %278 = vmatprep.subr.mxu0 0.0
    %279 = vmatpush2.msra.mxu0 0.0
    %280 = vmatprep.subr.mxu0 0.0
    %281 = vmatpush2.msra.mxu0 0.0
    %282 = vmatprep.subr.mxu0 0.0
    %283 = vmatpush2.msra.mxu0 0.0
    %284 = vmatprep.subr.mxu0 0.0
    %285 = vmatpush2.msra.mxu0 0.0
    %286 = vmatprep.subr.mxu0 0.0
    %287 = vmatpush2.msra.mxu0 0.0
    %288 = vmatprep.subr.mxu0 0.0
    %289 = vmatpush2.msra.mxu0 0.0
    %290 = vmatprep.subr.mxu0 0.0
    %291 = vmatpush2.msra.mxu0 0.0
    %292 = vmatprep.subr.mxu0 0.0
    %293 = vmatpush2.msra.mxu0 0.0
    %294 = vmatprep.subr.mxu0 0.0
    %295 = vmatpush2.msra.mxu0 0.0
    %296 = vmatprep.subr.mxu0 0.0
    %297 = vmatpush2.msra.mxu0 0.0
    %298 = vmatprep.subr.mxu0 0.0
    %299 = vmatpush2.msra.mxu0 0.0
    %300 = vmatprep.subr.mxu0 0.0
    %301 = vmatpush2.msra.mxu0 0.0
    %302 = vmatprep.mubr.f32.mxu0 0.0
    %303 = vmatmul.mubr.f32.gmra.mxu0 %v236
    %v304 = vpop.f32.mrf.mxu0
    %v305 = vadd.f32 %v233, %v304
    %v306 = vpop.f32.mrf.mxu0
    %307 = vdwg.mxu0
    %v308 = vsel %vm184, %v305, 0.0
    %v309 = vrot.slane %v308, 4
    %v310 = vadd.f32 %v308, %v309
    %v311 = vrot.slane %v310, 2
    %v312 = vadd.f32 %v310, %v311
    %v313 = vrot.slane %v312, 1
    %v314 = vadd.f32 %v312, %v313
    %v315 = vmul.f32 %v314, %v192
    %v316 = vsub.f32 %v305, %v315
    %v317 = vmul.f32 %v316, %v316
    %v318 = vsel %vm184, %v317, 0.0
    %v319 = vrot.slane %v318, 4
    %v320 = vadd.f32 %v318, %v319
    %v321 = vrot.slane %v320, 2
    %v322 = vadd.f32 %v320, %v321
    %v323 = vrot.slane %v322, 1
    %v324 = vadd.f32 %v322, %v323
    %v325 = vmul.f32 %v324, %v192
    %v326 = vadd.f32 %v325, 1e-05
    %v327 = vrsqrt.pop %v326
    %v328 = vmul.f32 %v227, %v327
    %v330 = vlaneseq
    %v331 = vshrl.u32 %v330, 7
    %v332 = vsub.s32 0, %v331
    %v333 = vrot.slane %v328, %v332
    %v335 = vmul.f32 %v316, %v333
    %v337 = vlaneseq
    %v338 = vshrl.u32 %v337, 7
    %v339 = vsub.s32 0, %v338
    %v340 = vrot.slane %v228, %v339
    %v342 = vadd.f32 %v335, %v340
    %v343 = vmax.f32 %v342, 0.0
    %v344 = vld [vmem:[#allocation8] sm:$0xff]
    %v345 = vld [vmem:[#allocation8 + $0x8] sm:$0xff]
    %v346 = vld [vmem:[#allocation8 + $0x10] sm:$0xff]
    %v347 = vld [vmem:[#allocation8 + $0x18] sm:$0xff]
    %v348 = vld [vmem:[%s10] sm:$0x1]
    %v349 = vld [vmem:[%s11] sm:$0x1]
    %v350 = vld [vmem:[%s12] sm:$0x1]
    %v352 = vlaneseq
    %v353 = vshrl.u32 %v352, 7
    %v354 = vsub.s32 0, %v353
    %v355 = vrot.slane %v348, %v354
    %v358 = vsel %vm184, %v343, 0
    %360 = vmatprep.subr.mxu0 0.0
    %361 = vmatpush1.msra.mxu0 0.0
    %362 = vmatprep.subr.mxu0 0.0
    %363 = vmatpush1.msra.mxu0 0.0
    %364 = vmatprep.subr.mxu0 0.0
    %365 = vmatpush1.msra.mxu0 0.0
    %366 = vmatprep.subr.mxu0 0.0
    %367 = vmatpush1.msra.mxu0 0.0
    %368 = vmatprep.subr.mxu0 0.0
    %369 = vmatpush1.msra.mxu0 0.0
    %370 = vmatprep.subr.mxu0 0.0
    %371 = vmatpush1.msra.mxu0 0.0
    %372 = vmatprep.subr.mxu0 0.0
    %373 = vmatpush1.msra.mxu0 0.0
    %374 = vmatprep.subr.mxu0 0.0
    %375 = vmatpush1.msra.mxu0 0.0
    %376 = vmatprep.subr.mxu0 0.0
    %377 = vmatpush1.msra.mxu0 0.0
    %378 = vmatprep.subr.mxu0 0.0
    %379 = vmatpush1.msra.mxu0 0.0
    %380 = vmatprep.subr.mxu0 0.0
    %381 = vmatpush1.msra.mxu0 0.0
    %382 = vmatprep.subr.mxu0 0.0
    %383 = vmatpush1.msra.mxu0 0.0
    %384 = vmatprep.subr.mxu0 0.0
    %385 = vmatpush1.msra.mxu0 %v347
    %386 = vmatprep.subr.mxu0 0.0
    %387 = vmatpush1.msra.mxu0 %v346
    %388 = vmatprep.subr.mxu0 0.0
    %389 = vmatpush1.msra.mxu0 %v345
    %390 = vmatprep.subr.mxu0 0.0
    %391 = vmatpush1.msra.mxu0 %v344
    %392 = vmatprep.subr.mxu0 0.0
    %393 = vmatpush2.msra.mxu0 0.0
    %394 = vmatprep.subr.mxu0 0.0
    %395 = vmatpush2.msra.mxu0 0.0
    %396 = vmatprep.subr.mxu0 0.0
    %397 = vmatpush2.msra.mxu0 0.0
    %398 = vmatprep.subr.mxu0 0.0
    %399 = vmatpush2.msra.mxu0 0.0
    %400 = vmatprep.subr.mxu0 0.0
    %401 = vmatpush2.msra.mxu0 0.0
    %402 = vmatprep.subr.mxu0 0.0
    %403 = vmatpush2.msra.mxu0 0.0
    %404 = vmatprep.subr.mxu0 0.0
    %405 = vmatpush2.msra.mxu0 0.0
    %406 = vmatprep.subr.mxu0 0.0
    %407 = vmatpush2.msra.mxu0 0.0
    %408 = vmatprep.subr.mxu0 0.0
    %409 = vmatpush2.msra.mxu0 0.0
    %410 = vmatprep.subr.mxu0 0.0
    %411 = vmatpush2.msra.mxu0 0.0
    %412 = vmatprep.subr.mxu0 0.0
    %413 = vmatpush2.msra.mxu0 0.0
    %414 = vmatprep.subr.mxu0 0.0
    %415 = vmatpush2.msra.mxu0 0.0
    %416 = vmatprep.subr.mxu0 0.0
    %417 = vmatpush2.msra.mxu0 0.0
    %418 = vmatprep.subr.mxu0 0.0
    %419 = vmatpush2.msra.mxu0 0.0
    %420 = vmatprep.subr.mxu0 0.0
    %421 = vmatpush2.msra.mxu0 0.0
    %422 = vmatprep.subr.mxu0 0.0
    %423 = vmatpush2.msra.mxu0 0.0
    %424 = vmatprep.mubr.f32.mxu0 0.0
    %425 = vmatmul.mubr.f32.gmra.mxu0 %v358
    %v426 = vpop.f32.mrf.mxu0
    %v427 = vadd.f32 %v355, %v426
    %v428 = vpop.f32.mrf.mxu0
    %429 = vdwg.mxu0
    %vm430 = vcmask 64512
    %v431 = vsel %vm430, %v427, 0.0
    %v432 = vrot.slane %v431, 4
    %v433 = vadd.f32 %v431, %v432
    %v434 = vrot.slane %v433, 2
    %v435 = vadd.f32 %v433, %v434
    %v436 = vrot.slane %v435, 1
    %v437 = vadd.f32 %v435, %v436
    %v438 = vmul.f32 %v437, %v192
    %v439 = vsub.f32 %v427, %v438
    %v440 = vmul.f32 %v439, %v439
    %v441 = vsel %vm430, %v440, 0.0
    %v442 = vrot.slane %v441, 4
    %v443 = vadd.f32 %v441, %v442
    %v444 = vrot.slane %v443, 2
    %v445 = vadd.f32 %v443, %v444
    %v446 = vrot.slane %v445, 1
    %v447 = vadd.f32 %v445, %v446
    %v448 = vmul.f32 %v447, %v192
    %v449 = vadd.f32 %v448, 1e-05
    %v450 = vrsqrt.pop %v449
    %v451 = vmul.f32 %v349, %v450
    %v453 = vlaneseq
    %v454 = vshrl.u32 %v453, 7
    %v455 = vsub.s32 0, %v454
    %v456 = vrot.slane %v451, %v455
    %v458 = vmul.f32 %v439, %v456
    %v460 = vlaneseq
    %v461 = vshrl.u32 %v460, 7
    %v462 = vsub.s32 0, %v461
    %v463 = vrot.slane %v350, %v462
    %v465 = vadd.f32 %v458, %v463
    %v466 = vxor.u32 %v465, 2147483648
    %v467 = vmul.f32 %v466, 1.442695
    %v468 = vpow.pop %v467
    %v469 = vadd.f32 %v468, 1.0
    %v470 = vrcp.pop %v469
    %v471 = vmul.f32 1.0, %v470
    %472 = vst.msk [vmem:[#allocation10] sm:$0xff] %vm430, %v471
    // Predicated region
    $region70: #{forward.1} parent=1 // pred_check
      _
    $region71: #{forward.1} parent=1 // pred_check_branch
      %474 = sbr.rel (0) target = $region73
    $region72: #{forward.1} parent=1 // pred_region
      %s476 = ssub.s32 128, 128
      %477 = vsyncadd [#allocation4], %s476
      %s479 = sshll.u32 [#allocation10], 4
      %s480 = int_to_ptr.vmem [resolvable:$true] %s479
      %482 = dma.vmem_to_hbm [thread:$0]  %s480, 128, %s13, [#allocation4]
    $region73: #{forward.1} parent=1 // pred_fallthru
      _
    // Predicated region
    $region74: #{forward.1} parent=1 // pred_check
      _
    $region75: #{forward.1} parent=1 // pred_check_branch
      %484 = sbr.rel (0) target = $region77
    $region76: #{forward.1} parent=1 // pred_region
      %485 = dma.done [#allocation4], 128
    $region77: #{forward.1} parent=1 // pred_fallthru
      _
    %486 = vsyncpa [#allocation3], 1
    %487 = vsyncpa [#allocation6], 1
    %488 = vsyncpa [#allocation9], 1
    %489 = vsyncpa [#allocation4], 1

</llo_original>
